<compile_context>
chip_gen: v5e
topology: v5e:2x2
jax: 0.10.0
libtpu: 0.0.40
codegen_flags: <defaults>
</compile_context>

<pallas_src>
import jax
import jax.numpy as jnp
from jax.experimental import pallas as pl
from jax.experimental.pallas import tpu as pltpu

_LANE = 128
_MAX_BLOCK_M = 512   # 512-row batch tiles (v6e: ~85% of HBM roofline vs 63% @ 256)


def _round_up(n, m):
    return ((n + m - 1) // m) * m


def _pad_axis(a, axis, target):
    pad = target - a.shape[axis]
    if pad == 0:
        return a
    widths = [(0, 0)] * a.ndim
    widths[axis] = (0, pad)
    return jnp.pad(a, widths)


def _block_m(batch):
    # Full-batch block when small (exempt from the (8,128) rule because it
    # equals the full array dim); otherwise a fixed 512-row tile, which also
    # guarantees >=2 grid steps at large batch for the v7x 2-TC megacore split.
    return batch if batch <= _MAX_BLOCK_M else _MAX_BLOCK_M


def _vmem_limit_bytes(*buf_bytes):
    # Explicit scoped-VMEM request: defaults (16/32/32 MiB on v5e/v6e/v7x) are
    # far below physical.  2x for double-buffering + headroom, capped well
    # inside v7x's 64 MiB physical VMEM.
    need = 2 * sum(int(b) for b in buf_bytes) + (2 << 20)
    return int(min(max(need, 4 << 20), 60 << 20))


# ----------------------------------------------------------------------------
# One-time parameter prep (parameter-load time, NOT the per-call path)
# ----------------------------------------------------------------------------
def prepare_linear_params(weight, bias, dtype=jnp.bfloat16):
    """depth == 1.  weight: (num_labels, input_dim) nn.Linear layout."""
    w_t = jnp.asarray(weight).T.astype(dtype)                     # (K, N)
    b_p = jnp.asarray(bias).astype(jnp.float32)[None, :]          # (1, N)
    return w_t, b_p


def prepare_mlp_params(w1, b1, w2, b2, dtype=jnp.bfloat16):
    """depth == 2.  w1: (hidden, in), w2: (out, hidden) nn.Linear layout.
    Hidden dim zero-padded to a lane multiple so the intermediate activation is
    lane-dense; padding is exact (zero weights/bias + relu keep pad cols at 0)."""
    hidden = w1.shape[0]
    h_pad = _round_up(hidden, _LANE)
    w1_t = _pad_axis(jnp.asarray(w1), 0, h_pad).T.astype(dtype)              # (K, H_pad)
    b1_p = _pad_axis(jnp.asarray(b1), 0, h_pad).astype(jnp.float32)[None, :]  # (1, H_pad)
    w2_t = _pad_axis(jnp.asarray(w2), 1, h_pad).T.astype(dtype)              # (H_pad, N)
    b2_p = jnp.asarray(b2).astype(jnp.float32)[None, :]                       # (1, N)
    return w1_t, b1_p, w2_t, b2_p


# ----------------------------------------------------------------------------
# Kernels
# ----------------------------------------------------------------------------
def _linear_kernel(x_ref, w_ref, b_ref, o_ref):
    # Cast f32 activations to bf16 inside the kernel (saves a wrapper-side
    # cast pass over HBM); f32 MXU accumulation, f32 bias epilogue.
    xb = x_ref[...].astype(w_ref.dtype)
    acc = jnp.dot(xb, w_ref[...], preferred_element_type=jnp.float32)
    o_ref[...] = (acc + b_ref[...]).astype(o_ref.dtype)


def _mlp2_kernel(x_ref, w1_ref, b1_ref, w2_ref, b2_ref, o_ref):
    xb = x_ref[...].astype(w1_ref.dtype)
    h32 = jnp.dot(xb, w1_ref[...], preferred_element_type=jnp.float32)
    # Hidden activation formed once, directly in the MXU operand dtype.
    h = jnp.maximum(h32 + b1_ref[...], 0.0).astype(w2_ref.dtype)
    acc = jnp.dot(h, w2_ref[...], preferred_element_type=jnp.float32)
    o_ref[...] = (acc + b2_ref[...]).astype(o_ref.dtype)


# ----------------------------------------------------------------------------
# Forward wrappers (take pre-prepped params)
# ----------------------------------------------------------------------------
@jax.jit
def linear_head(x, w_t, b_p):
    """depth == 1.  x: (batch, K) f32, w_t: (K, N) bf16, b_p: (1, N) f32."""
    batch, k = x.shape
    n = w_t.shape[1]
    bm = _block_m(batch)
    grid = (pl.cdiv(batch, bm),)
    vmem = _vmem_limit_bytes(bm * k * x.dtype.itemsize,
                             k * n * w_t.dtype.itemsize,
                             n * 4,
                             bm * n * x.dtype.itemsize)
    return pl.pallas_call(
        _linear_kernel,
        out_shape=jax.ShapeDtypeStruct((batch, n), x.dtype),
        grid=grid,
        in_specs=[
            pl.BlockSpec((bm, k), lambda i: (i, 0)),      # batch-tiled acts (f32)
            pl.BlockSpec((k, n), lambda i: (0, 0)),       # resident weight
            pl.BlockSpec((1, n), lambda i: (0, 0)),       # resident bias
        ],
        out_specs=pl.BlockSpec((bm, n), lambda i: (i, 0)),
        compiler_params=pltpu.CompilerParams(
            dimension_semantics=("parallel",),
            vmem_limit_bytes=vmem),
    )(x, w_t, b_p)


@jax.jit
def mlp_head(x, w1_t, b1_p, w2_t, b2_p):
    """depth == 2.  x: (batch, K) f32; w1_t: (K, H_pad) bf16; w2_t: (H_pad, N) bf16."""
    batch, k = x.shape
    h_pad = w1_t.shape[1]
    n = w2_t.shape[1]
    bm = _block_m(batch)
    grid = (pl.cdiv(batch, bm),)
    vmem = _vmem_limit_bytes(bm * k * x.dtype.itemsize,
                             k * h_pad * w1_t.dtype.itemsize,
                             h_pad * 4,
                             h_pad * n * w2_t.dtype.itemsize,
                             n * 4,
                             bm * h_pad * 4,                    # hidden intermediate
                             bm * n * x.dtype.itemsize)
    return pl.pallas_call(
        _mlp2_kernel,
        out_shape=jax.ShapeDtypeStruct((batch, n), x.dtype),
        grid=grid,
        in_specs=[
            pl.BlockSpec((bm, k), lambda i: (i, 0)),
            pl.BlockSpec((k, h_pad), lambda i: (0, 0)),
            pl.BlockSpec((1, h_pad), lambda i: (0, 0)),
            pl.BlockSpec((h_pad, n), lambda i: (0, 0)),
            pl.BlockSpec((1, n), lambda i: (0, 0)),
        ],
        out_specs=pl.BlockSpec((bm, n), lambda i: (i, 0)),
        compiler_params=pltpu.CompilerParams(
            dimension_semantics=("parallel",),
            vmem_limit_bytes=vmem),
    )(x, w1_t, b1_p, w2_t, b2_p)


# ----------------------------------------------------------------------------
# Main
# ----------------------------------------------------------------------------
if __name__ == "__main__":
    key = jax.random.PRNGKey(0)

    batch = 2
    input_dim = 32
    num_labels = 8
    hidden = input_dim // 2          # 16

    k_x, k_w, k_b, k_w1, k_b1, k_w2, k_b2 = jax.random.split(key, 7)

    x = jax.random.normal(k_x, (batch, input_dim), dtype=jnp.float32)

    # depth == 1 parameters (nn.Linear(input_dim, num_labels))
    w = jax.random.normal(k_w, (num_labels, input_dim), dtype=jnp.float32) * 0.1
    b = jax.random.normal(k_b, (num_labels,), dtype=jnp.float32) * 0.1

    # depth == 2 parameters
    w1 = jax.random.normal(k_w1, (hidden, input_dim), dtype=jnp.float32) * 0.1
    b1 = jax.random.normal(k_b1, (hidden,), dtype=jnp.float32) * 0.1
    w2 = jax.random.normal(k_w2, (num_labels, hidden), dtype=jnp.float32) * 0.1
    b2 = jax.random.normal(k_b2, (num_labels,), dtype=jnp.float32) * 0.1

    # One-time parameter prep (hoisted out of the per-call path).
    w_t, b_p = prepare_linear_params(w, b)
    w1_t, b1_p, w2_t, b2_p = prepare_mlp_params(w1, b1, w2, b2)

    # bf16 MXU operands vs f32 reference => loosened tolerance.
    tol = dict(atol=3e-2, rtol=3e-2)

    # depth == 1
    y1 = jax.block_until_ready(linear_head(x, w_t, b_p))
    y1_ref = x @ w.T + b
    assert y1.shape == (batch, num_labels)
    assert jnp.allclose(y1, y1_ref, **tol), float(jnp.max(jnp.abs(y1 - y1_ref)))

    # depth == 2
    y2 = jax.block_until_ready(mlp_head(x, w1_t, b1_p, w2_t, b2_p))
    y2_ref = jnp.maximum(x @ w1.T + b1, 0.0) @ w2.T + b2
    assert y2.shape == (batch, num_labels)
    assert jnp.allclose(y2, y2_ref, **tol), float(jnp.max(jnp.abs(y2 - y2_ref)))

    print("KERNEL_OK")
</pallas_src>

<mosaic_0001>
module attributes {stable_mosaic.version = 11 : i64} {
  func.func @_linear_kernel(%arg0: i32, %arg1: memref<2x32xf32, #tpu.memory_space<vmem>>, %arg2: memref<32x8xbf16, #tpu.memory_space<vmem>>, %arg3: memref<1x8xf32, #tpu.memory_space<vmem>>, %arg4: memref<2x8xf32, #tpu.memory_space<vmem>>) attributes {dimension_semantics = [#tpu.dimension_semantics<parallel>], iteration_bounds = array<i64: 1>, scalar_prefetch = 0 : i64, scratch_operands = 0 : i64, tpu.core_type = #tpu.core_type<tc>, window_params = [{transform_indices = @transform_0, window_bounds = array<i64: 2, 32>}, {pipeline_mode = #tpu.pipeline_mode<synchronous>, transform_indices = @transform_1, window_bounds = array<i64: 32, 8>}, {pipeline_mode = #tpu.pipeline_mode<synchronous>, transform_indices = @transform_2, window_bounds = array<i64: 1, 8>}, {transform_indices = @transform_3, window_bounds = array<i64: 2, 8>}]} {
    %c0 = arith.constant 0 : index
    %c0_0 = arith.constant 0 : index
    %0 = vector.load %arg1[%c0, %c0_0] : memref<2x32xf32, #tpu.memory_space<vmem>>, vector<2x32xf32>
    %1 = arith.truncf %0 : vector<2x32xf32> to vector<2x32xbf16>
    %c0_1 = arith.constant 0 : index
    %c0_2 = arith.constant 0 : index
    %2 = vector.load %arg2[%c0_1, %c0_2] : memref<32x8xbf16, #tpu.memory_space<vmem>>, vector<32x8xbf16>
    %cst = arith.constant dense<0.000000e+00> : vector<2x8xf32>
    %3 = tpu.matmul %1, %2, %cst {dimension_numbers = #tpu.dot_dimension_numbers<[1], [0], [0], [1], [0, 0, 1, 1], [], []>} : vector<2x32xbf16>, vector<32x8xbf16>, vector<2x8xf32> -> vector<2x8xf32>
    %c0_3 = arith.constant 0 : index
    %c0_4 = arith.constant 0 : index
    %4 = vector.load %arg3[%c0_3, %c0_4] : memref<1x8xf32, #tpu.memory_space<vmem>>, vector<1x8xf32>
    %5 = vector.broadcast %4 : vector<1x8xf32> to vector<2x8xf32>
    %6 = arith.addf %3, %5 : vector<2x8xf32>
    %c0_5 = arith.constant 0 : index
    %c0_6 = arith.constant 0 : index
    %7 = vector.load %arg4[%c0_5, %c0_6] : memref<2x8xf32, #tpu.memory_space<vmem>>, vector<2x8xf32>
    tpu.vector_store %arg4[%c0_5, %c0_6], %6 {strides = array<i32>} : memref<2x8xf32, #tpu.memory_space<vmem>>, vector<2x8xf32>,
    return
  }
  func.func @transform_0(%arg0: i32) -> (i32, i32) {
    %c0_i32 = arith.constant 0 : i32
    %c0_i32_0 = arith.constant 0 : i32
    return %arg0, %c0_i32 : i32, i32
  }
  func.func @transform_1(%arg0: i32) -> (i32, i32) {
    %c0_i32 = arith.constant 0 : i32
    %c0_i32_0 = arith.constant 0 : i32
    %c0_i32_1 = arith.constant 0 : i32
    return %c0_i32, %c0_i32_0 : i32, i32
  }
  func.func @transform_2(%arg0: i32) -> (i32, i32) {
    %c0_i32 = arith.constant 0 : i32
    %c0_i32_0 = arith.constant 0 : i32
    %c0_i32_1 = arith.constant 0 : i32
    return %c0_i32, %c0_i32_0 : i32, i32
  }
  func.func @transform_3(%arg0: i32) -> (i32, i32) {
    %c0_i32 = arith.constant 0 : i32
    %c0_i32_0 = arith.constant 0 : i32
    return %arg0, %c0_i32 : i32, i32
  }
}

</mosaic_0001>

<llo_original>
// kernel: linear_head.1
$region0: #{linear_head.1}
  #allocation0 [shape = 'u32[]', space=smem, size = 0x4, offset = 0x4, fixed_abs, tag = 'smem constant byte address 0x4 - core index']
  #allocation1 [shape = 'u32[72,128]{1,0:T(1,128)}', space=vmem, size = 0x9000, scoped, tag = 'internal scratch']
  %s0 = inlined_call_operand.vmem [shape: f32[2,32], index: 0, kind: input, shape index: {}]
  %s1 = inlined_call_operand.vmem [shape: bf16[32,8], index: 1, kind: input, shape index: {}]
  %s2 = inlined_call_operand.vmem [shape: f32[1,8], index: 2, kind: input, shape index: {}]
  %s3 = inlined_call_operand.hbm [shape: f32[2,8], index: 3, kind: output, shape index: {}]
  %s4 = sld [smem:[#allocation0]]
  $region22: #{linear_head.1} parent=0
    _
  %s6 = ssub.s32 1, %s4
  %s7 = scalar_select 0, %s6, %s4
  $region1: #{linear_head.1} parent=0
    #allocation2 [shape = 'u8[1024]{0}', space=vmem, size = 0x400, scoped, tag = 'output window, operand 0, single buffered']
    #allocation3 [shape = 's32[1]{0}', space=sflag, size = 0x4, scoped, tag = 'scoped memory for linear_head.1']
    %8 = vsyncpa [#allocation3], 0
    // Predicated region
    $region2: #{linear_head.1} parent=1 // pred_check
      _
    $region3: #{linear_head.1} parent=1 // pred_check_branch
      %10 = sbr.rel (0) target = $region5
    $region4: #{linear_head.1} parent=1 // pred_region
      _
    $region5: #{linear_head.1} parent=1 // pred_fallthru
      _
    // Predicated region
    $region6: #{linear_head.1} parent=1 // pred_check
      _
    $region7: #{linear_head.1} parent=1 // pred_check_branch
      %12 = sbr.rel (0) target = $region9
    $region8: #{linear_head.1} parent=1 // pred_region
      _
    $region9: #{linear_head.1} parent=1 // pred_fallthru
      _
    // Predicated region
    $region10: #{linear_head.1} parent=1 // pred_check
      _
    $region11: #{linear_head.1} parent=1 // pred_check_branch
      %14 = sbr.rel (0) target = $region13
    $region12: #{linear_head.1} parent=1 // pred_region
      _
    $region13: #{linear_head.1} parent=1 // pred_fallthru
      _
    %v16 = vld [vmem:[%s0] sm:$0x3]
    %v17 = vpack.c.bf16 %v16, %v16
    %v18 = vld [vmem:[%s1] sm:$0xf]
    %v19 = vld [vmem:[%s1 + $0x4] sm:$0xf]
    %v20 = vld [vmem:[%s1 + $0x8] sm:$0xf]
    %v21 = vld [vmem:[%s1 + $0xc] sm:$0xf]
    %v22 = vld [vmem:[%s2] sm:$0x1]
    %v24 = vperm.slane %v22, 0
    %v30 = vunpack.c.l.b16 %v18
    %v31 = vunpack.c.l.b16 %v19
    %v32 = vunpack.c.l.b16 %v20
    %v33 = vunpack.c.l.b16 %v21
    %v34 = vpack.c.b16 %v31, %v30
    %v35 = vpack.c.b16 %v33, %v32
    %vm38 = vcmask 261120
    %v40 = vsel %vm38, %v17, 0
    %42 = vmatpush.bf16.msra.mxu0 0
    %43 = vmatpush.bf16.msra.mxu0 0
    %44 = vmatpush.bf16.msra.mxu0 0
    %45 = vmatpush.bf16.msra.mxu0 0
    %46 = vmatpush.bf16.msra.mxu0 0
    %47 = vmatpush.bf16.msra.mxu0 0
    %48 = vmatpush.bf16.msra.mxu0 %v35
    %49 = vmatpush.bf16.msra.mxu0 %v34
    %50 = vmatmul.bf16.gmra.mxu0 %v40
    %v51 = vpop.f32.mrf.mxu0
    %v52 = vadd.f32 %v24, %v51
    %v53 = vpop.f32.mrf.mxu0
    %54 = vdwg.mxu0
    %vm55 = vcmask 58368
    %56 = vst.msk [vmem:[#allocation2] sm:$0x3] %vm55, %v52
    // Predicated region
    $region14: #{linear_head.1} parent=1 // pred_check
      _
    $region15: #{linear_head.1} parent=1 // pred_check_branch
      %58 = sbr.rel (0) target = $region17
    $region16: #{linear_head.1} parent=1 // pred_region
      %60 = vsyncadd [#allocation3], 0
      %s62 = sshll.u32 [#allocation2], 4
      %s63 = int_to_ptr.vmem [resolvable:$true] %s62
      %s64 = sshll.u32 %s3, 4
      %s65 = int_to_ptr.hbm [resolvable:$true] %s64
      %67 = dma.vmem_to_hbm [thread:$0]  %s63, 32, %s65, [#allocation3]
    $region17: #{linear_head.1} parent=1 // pred_fallthru
      _
    // Predicated region
    $region18: #{linear_head.1} parent=1 // pred_check
      _
    $region19: #{linear_head.1} parent=1 // pred_check_branch
      %69 = sbr.rel (0) target = $region21
    $region20: #{linear_head.1} parent=1 // pred_region
      %71 = dma.done [#allocation3], 32
    $region21: #{linear_head.1} parent=1 // pred_fallthru
      _
    %72 = vsyncpa [#allocation3], 1

</llo_original>
